<compile_context>
chip_gen: v5e
topology: v5e:2x2
jax: 0.10.0
libtpu: 0.0.40
codegen_flags: <defaults>
</compile_context>

<pallas_src>
import functools

import jax
import jax.numpy as jnp
from jax.experimental import pallas as pl
from jax.experimental.pallas import tpu as pltpu


def gat_relation_kernel(x_ref, p_ref, maskb_ref, wv_ref, vec_ref, gbias_ref,
                        out_ref):
    """Fused GAT_relation forward for one block of Bb batch elements.

    x_ref:     (Bb, L, H)  ra1 queries / ra2 key-value source
    p_ref:     (Bb, L, H)  ra1 key-value source / ra2 queries
    maskb_ref: (Bb, 1, L)  additive score bias for ra2 ((mask-1)*1e9)
    wv_ref:    (2, H, H)   value projections [wv1, wv2]
    vec_ref:   (8, H)      rows: bv1, uk1, ga1, gab1, bv2, uk2, ga2, gab2
    gbias_ref: (2,) SMEM   gate biases [gbias1, gbias2]
    out_ref:   (Bb, L, H)  x_new + p_new
    """
    x = x_ref[...]
    p = p_ref[...]
    vecs = vec_ref[...]
    bv1, uk1, ga1, gab1 = vecs[0:1], vecs[1:2], vecs[2:3], vecs[3:4]
    bv2, uk2, ga2, gab2 = vecs[4:5], vecs[5:6], vecs[6:7], vecs[7:8]

    def stage(q, kv, uk, wv, bv, ga, gab, gbias, bias_row=None):
        # score[b,i,j] = q[b,i].sa + kv[b,j].uk + const.  The q-side and constant
        # terms are uniform over j, so they cancel in the softmax; the attention
        # weights are query-independent (one weight row per batch element).
        sk = jnp.sum(kv * uk, axis=-1)                          # (Bb, L)
        if bias_row is not None:
            sk = sk + bias_row
        sk = sk - jnp.max(sk, axis=-1, keepdims=True)
        e = jnp.exp(sk)
        attn = e * pl.reciprocal(jnp.sum(e, axis=-1, keepdims=True), approx=True)
        # context = (attn @ kv) @ Wv + bv  -> one H-vector per batch element.
        wkv = jnp.sum(attn[:, :, None] * kv, axis=1)            # (Bb, H)
        ctx = jnp.dot(wkv, wv, preferred_element_type=jnp.float32) + bv
        # gate(cat([ctx + q, q])) = sigmoid(q.(ga+gb) + ctx.ga + gbias)
        gz = (jnp.sum(q * gab, axis=-1, keepdims=True)
              + jnp.sum(ctx * ga, axis=-1, keepdims=True)[:, None, :]
              + gbias)
        g = jax.nn.sigmoid(gz)                                  # (Bb, L, 1)
        # ra(q, kv) = q + g*ctx; the fused `+ q` residual gives 2q + g*ctx.
        return 2.0 * q + g * ctx[:, None, :]

    # ra1(x, p) + x  (no mask)
    x_new = stage(x, p, uk1, wv_ref[0], bv1, ga1, gab1, gbias_ref[0])
    # ra2(p, x_new, mask) + p  (mask over x_new's tokens)
    p_new = stage(p, x_new, uk2, wv_ref[1], bv2, ga2, gab2, gbias_ref[1],
                  bias_row=maskb_ref[...][:, 0, :])
    out_ref[...] = x_new + p_new                                # final x + p


def _pick_batch_block(B, L, H, bytes_budget=4 << 20):
    """Largest divisor of B whose per-block (x, p, out) tiles fit the budget."""
    per_b = 3 * L * H * 4  # f32
    bb = max(1, min(B, bytes_budget // max(per_b, 1)))
    while bb > 1 and B % bb:
        bb -= 1
    return bb


def fold_ra_params(params):
    """Fold one RelationAttention's parameters for the fused kernel.

    score(cat(q_i, k_j)) = q_i.sa + k_j.sb + sbias; only k_j.sb varies along the
    softmax axis, so Wq/bq/sa/sbias and bk.sb drop out (shift invariance).
    k_j.sb = x_j @ (sb @ Wk^T)^T, so the key path reduces to one vector uk.
    The gate linear splits into ga (context side) and ga+gb (query side).
    """
    wq, bq, wk, bk, wv, bv, sa, sb, sbias, ga, gb, gbias = params
    del wq, bq, bk, sa, sbias
    uk = sb @ wk.T                     # (1, H)
    gab = ga + gb                      # (1, H)
    return wv, bv, uk, ga, gab, gbias.reshape(())


@jax.jit
def gat_relation(x, p, mask, params1, params2):
    """GAT_relation.forward: x, p are (B, L, H); mask is (B, L) over x's tokens."""
    B, L, H = x.shape
    assert p.shape == (B, L, H), "final `x + p` requires matching shapes"

    wv1, bv1, uk1, ga1, gab1, gbias1 = fold_ra_params(params1)
    wv2, bv2, uk2, ga2, gab2, gbias2 = fold_ra_params(params2)

    wvs = jnp.stack([wv1, wv2]).astype(jnp.float32)              # (2, H, H)
    vecs = jnp.concatenate([bv1, uk1, ga1, gab1,
                            bv2, uk2, ga2, gab2],
                           axis=0).astype(jnp.float32)           # (8, H)
    gbias = jnp.stack([gbias1, gbias2]).astype(jnp.float32)      # (2,)
    maskb = ((mask.astype(jnp.float32) - 1.0) * 1e9).reshape(B, 1, L)

    Bb = _pick_batch_block(B, L, H)

    def rep(shape):
        nd = len(shape)
        return pl.BlockSpec(shape, lambda b, _nd=nd: (0,) * _nd)

    return pl.pallas_call(
        gat_relation_kernel,
        out_shape=jax.ShapeDtypeStruct((B, L, H), jnp.float32),
        grid_spec=pltpu.PrefetchScalarGridSpec(
            num_scalar_prefetch=0,
            grid=(B // Bb,),
            in_specs=[
                pl.BlockSpec((Bb, L, H), lambda b: (b, 0, 0)),      # x
                pl.BlockSpec((Bb, L, H), lambda b: (b, 0, 0)),      # p
                pl.BlockSpec((Bb, 1, L), lambda b: (b, 0, 0)),      # mask bias
                rep((2, H, H)),                                     # value weights
                rep((8, H)),                                        # packed vectors
                pl.BlockSpec(memory_space=pltpu.MemorySpace.SMEM),  # gate biases
            ],
            out_specs=pl.BlockSpec((Bb, L, H), lambda b: (b, 0, 0)),
        ),
        compiler_params=pltpu.CompilerParams(
            dimension_semantics=("parallel",)),
    )(x, p, maskb, wvs, vecs, gbias)


def init_ra_params(key, H):
    """Deterministic init matching nn.Linear shapes (weights stored pre-transposed)."""
    ks = jax.random.split(key, 10)
    bound = 1.0 / jnp.sqrt(jnp.float32(H))

    def lin(kw, kb):
        w = jax.random.uniform(kw, (H, H), jnp.float32, -bound, bound)
        b = jax.random.uniform(kb, (1, H), jnp.float32, -bound, bound)
        return w, b

    wq, bq = lin(ks[0], ks[1])
    wk, bk = lin(ks[2], ks[3])
    wv, bv = lin(ks[4], ks[5])

    sbound = 1.0 / jnp.sqrt(jnp.float32(2 * H))
    sw = jax.random.uniform(ks[6], (1, 2 * H), jnp.float32, -sbound, sbound)
    sa, sb = sw[:, :H], sw[:, H:]
    sbias = jax.random.uniform(ks[7], (1, 1), jnp.float32, -sbound, sbound)

    gw = jax.random.uniform(ks[8], (1, 2 * H), jnp.float32, -sbound, sbound)
    ga, gb = gw[:, :H], gw[:, H:]
    gbias = jax.random.uniform(ks[9], (1, 1), jnp.float32, -sbound, sbound)

    return (wq, bq, wk, bk, wv, bv, sa, sb, sbias, ga, gb, gbias)


def relation_attention_ref(p, x, mask, params):
    """Pure-JAX reference mirroring the PyTorch forward (raw params)."""
    wq, bq, wk, bk, wv, bv, sa, sb, sbias, ga, gb, gbias = params
    q = p @ wq + bq
    k = x @ wk + bk
    v = x @ wv + bv
    score = (q * sa).sum(-1)[:, :, None] + (k * sb).sum(-1)[:, None, :] + sbias[0, 0]
    score = jnp.where(mask[:, None, :] == 0.0, -1e9, score)
    attn = jax.nn.softmax(score, axis=2)
    out = jnp.einsum("bcl,bld->bcd", attn, v) + p
    g = jax.nn.sigmoid((out * ga).sum(-1, keepdims=True)
                       + (p * gb).sum(-1, keepdims=True) + gbias[0, 0])
    return g * out + (1.0 - g) * p


def gat_relation_ref(x, p, mask, params1, params2):
    B, Lp = p.shape[0], p.shape[1]
    x_ = relation_attention_ref(x, p, jnp.ones((B, Lp), jnp.float32), params1)
    x = x_ + x
    p_ = relation_attention_ref(p, x, mask, params2)
    p = p_ + p
    return x + p


if __name__ == "__main__":
    B, L, H = 2, 8, 32  # x and p both (B, L, H); final `x + p` requires equal seq lens

    key = jax.random.PRNGKey(0)
    kx, kp, k1, k2 = jax.random.split(key, 4)
    x = jax.random.normal(kx, (B, L, H), jnp.float32)
    p = jax.random.normal(kp, (B, L, H), jnp.float32)
    # mask over x's sequence: 1 = valid token, 0 = padding
    lens = jnp.array([6, 4], jnp.int32)
    mask = (jnp.arange(L)[None, :] < lens[:, None]).astype(jnp.float32)

    params1 = init_ra_params(k1, H)
    params2 = init_ra_params(k2, H)

    out = gat_relation(x, p, mask, params1, params2)
    out = jax.block_until_ready(out)

    ref = gat_relation_ref(x, p, mask, params1, params2)
    assert out.shape == (B, L, H)
    # tolerance loosened slightly for pl.reciprocal(approx=True) in the softmax
    assert jnp.allclose(out, ref, rtol=5e-3, atol=5e-3), \
        f"max abs diff {jnp.max(jnp.abs(out - ref))}"

    print("KERNEL_OK")
</pallas_src>

<mosaic_0001>
module attributes {stable_mosaic.version = 11 : i64} {
  func.func @gat_relation_kernel(%arg0: i32, %arg1: memref<2x8x32xf32, #tpu.memory_space<vmem>>, %arg2: memref<2x8x32xf32, #tpu.memory_space<vmem>>, %arg3: memref<2x1x8xf32, #tpu.memory_space<vmem>>, %arg4: memref<2x32x32xf32, #tpu.memory_space<vmem>>, %arg5: memref<8x32xf32, #tpu.memory_space<vmem>>, %arg6: memref<2xf32, #tpu.memory_space<smem>>, %arg7: memref<2x8x32xf32, #tpu.memory_space<vmem>>) attributes {dimension_semantics = [#tpu.dimension_semantics<parallel>], iteration_bounds = array<i64: 1>, scalar_prefetch = 0 : i64, scratch_operands = 0 : i64, tpu.core_type = #tpu.core_type<tc>, window_params = [{transform_indices = @transform_0, window_bounds = array<i64: 2, 8, 32>}, {transform_indices = @transform_1, window_bounds = array<i64: 2, 8, 32>}, {transform_indices = @transform_2, window_bounds = array<i64: 2, 1, 8>}, {pipeline_mode = #tpu.pipeline_mode<synchronous>, transform_indices = @transform_3, window_bounds = array<i64: 2, 32, 32>}, {pipeline_mode = #tpu.pipeline_mode<synchronous>, transform_indices = @transform_4, window_bounds = array<i64: 8, 32>}, {transform_indices = @transform_5, window_bounds = array<i64: 2>}, {transform_indices = @transform_6, window_bounds = array<i64: 2, 8, 32>}]} {
    %c0 = arith.constant 0 : index
    %c0_0 = arith.constant 0 : index
    %c0_1 = arith.constant 0 : index
    %0 = vector.load %arg1[%c0, %c0_0, %c0_1] : memref<2x8x32xf32, #tpu.memory_space<vmem>>, vector<2x8x32xf32>
    %c0_2 = arith.constant 0 : index
    %c0_3 = arith.constant 0 : index
    %c0_4 = arith.constant 0 : index
    %1 = vector.load %arg2[%c0_2, %c0_3, %c0_4] : memref<2x8x32xf32, #tpu.memory_space<vmem>>, vector<2x8x32xf32>
    %c0_5 = arith.constant 0 : index
    %c0_6 = arith.constant 0 : index
    %2 = vector.load %arg5[%c0_5, %c0_6] : memref<8x32xf32, #tpu.memory_space<vmem>>, vector<8x32xf32>
    %3 = vector.extract_strided_slice %2 {offsets = [0, 0], sizes = [1, 32], strides = [1, 1]} : vector<8x32xf32> to vector<1x32xf32>
    %4 = vector.extract_strided_slice %2 {offsets = [1, 0], sizes = [1, 32], strides = [1, 1]} : vector<8x32xf32> to vector<1x32xf32>
    %5 = vector.extract_strided_slice %2 {offsets = [2, 0], sizes = [1, 32], strides = [1, 1]} : vector<8x32xf32> to vector<1x32xf32>
    %6 = vector.extract_strided_slice %2 {offsets = [3, 0], sizes = [1, 32], strides = [1, 1]} : vector<8x32xf32> to vector<1x32xf32>
    %7 = vector.extract_strided_slice %2 {offsets = [4, 0], sizes = [1, 32], strides = [1, 1]} : vector<8x32xf32> to vector<1x32xf32>
    %8 = vector.extract_strided_slice %2 {offsets = [5, 0], sizes = [1, 32], strides = [1, 1]} : vector<8x32xf32> to vector<1x32xf32>
    %9 = vector.extract_strided_slice %2 {offsets = [6, 0], sizes = [1, 32], strides = [1, 1]} : vector<8x32xf32> to vector<1x32xf32>
    %10 = vector.extract_strided_slice %2 {offsets = [7, 0], sizes = [1, 32], strides = [1, 1]} : vector<8x32xf32> to vector<1x32xf32>
    %c0_7 = arith.constant 0 : index
    %c0_8 = arith.constant 0 : index
    %c0_9 = arith.constant 0 : index
    %11 = vector.load %arg4[%c0_7, %c0_8, %c0_9] : memref<2x32x32xf32, #tpu.memory_space<vmem>>, vector<1x32x32xf32>
    %12 = vector.shape_cast %11 : vector<1x32x32xf32> to vector<32x32xf32>
    %c0_10 = arith.constant 0 : index
    %13 = memref.load %arg6[%c0_10] : memref<2xf32, #tpu.memory_space<smem>>
    %14 = vector.shape_cast %4 : vector<1x32xf32> to vector<1x1x32xf32>
    %15 = vector.broadcast %14 : vector<1x1x32xf32> to vector<2x8x32xf32>
    %16 = arith.mulf %1, %15 : vector<2x8x32xf32>
    %cst = arith.constant dense<0.000000e+00> : vector<2x8xf32>
    %17 = vector.multi_reduction <add>, %16, %cst [2] : vector<2x8x32xf32> to vector<2x8xf32>
    %cst_11 = arith.constant dense<0xFF800000> : vector<2xf32>
    %18 = vector.multi_reduction <maximumf>, %17, %cst_11 [1] : vector<2x8xf32> to vector<2xf32>
    %19 = vector.shape_cast %18 : vector<2xf32> to vector<2x1xf32>
    %20 = vector.broadcast %19 : vector<2x1xf32> to vector<2x8xf32>
    %21 = arith.subf %17, %20 : vector<2x8xf32>
    %22 = math.exp %21 : vector<2x8xf32>
    %cst_12 = arith.constant dense<0.000000e+00> : vector<2xf32>
    %23 = vector.multi_reduction <add>, %22, %cst_12 [1] : vector<2x8xf32> to vector<2xf32>
    %24 = vector.shape_cast %23 : vector<2xf32> to vector<2x1xf32>
    %25 = tpu.reciprocal %24 {approx = true} : vector<2x1xf32> -> vector<2x1xf32>
    %26 = vector.broadcast %25 : vector<2x1xf32> to vector<2x8xf32>
    %27 = arith.mulf %22, %26 : vector<2x8xf32>
    %28 = vector.shape_cast %27 : vector<2x8xf32> to vector<2x8x1xf32>
    %29 = vector.broadcast %28 : vector<2x8x1xf32> to vector<2x8x32xf32>
    %30 = arith.mulf %29, %1 : vector<2x8x32xf32>
    %cst_13 = arith.constant dense<0.000000e+00> : vector<2x32xf32>
    %31 = vector.multi_reduction <add>, %30, %cst_13 [1] : vector<2x8x32xf32> to vector<2x32xf32>
    %cst_14 = arith.constant dense<0.000000e+00> : vector<2x32xf32>
    %32 = tpu.matmul %31, %12, %cst_14 {dimension_numbers = #tpu.dot_dimension_numbers<[1], [0], [0], [1], [0, 0, 1, 1], [], []>} : vector<2x32xf32>, vector<32x32xf32>, vector<2x32xf32> -> vector<2x32xf32>
    %33 = vector.broadcast %3 : vector<1x32xf32> to vector<2x32xf32>
    %34 = arith.addf %32, %33 : vector<2x32xf32>
    %35 = vector.shape_cast %6 : vector<1x32xf32> to vector<1x1x32xf32>
    %36 = vector.broadcast %35 : vector<1x1x32xf32> to vector<2x8x32xf32>
    %37 = arith.mulf %0, %36 : vector<2x8x32xf32>
    %cst_15 = arith.constant dense<0.000000e+00> : vector<2x8xf32>
    %38 = vector.multi_reduction <add>, %37, %cst_15 [2] : vector<2x8x32xf32> to vector<2x8xf32>
    %39 = vector.shape_cast %38 : vector<2x8xf32> to vector<2x8x1xf32>
    %40 = vector.broadcast %5 : vector<1x32xf32> to vector<2x32xf32>
    %41 = arith.mulf %34, %40 : vector<2x32xf32>
    %cst_16 = arith.constant dense<0.000000e+00> : vector<2xf32>
    %42 = vector.multi_reduction <add>, %41, %cst_16 [1] : vector<2x32xf32> to vector<2xf32>
    %43 = vector.shape_cast %42 : vector<2xf32> to vector<2x1xf32>
    %44 = vector.shape_cast %43 : vector<2x1xf32> to vector<2x1x1xf32>
    %45 = vector.broadcast %44 : vector<2x1x1xf32> to vector<2x8x1xf32>
    %46 = arith.addf %39, %45 : vector<2x8x1xf32>
    %47 = vector.broadcast %13 : f32 to vector<2x8x1xf32>
    %48 = arith.addf %46, %47 : vector<2x8x1xf32>
    %49 = arith.negf %48 : vector<2x8x1xf32>
    %50 = math.exp %49 : vector<2x8x1xf32>
    %cst_17 = arith.constant 1.000000e+00 : f32
    %51 = vector.broadcast %cst_17 : f32 to vector<2x8x1xf32>
    %52 = arith.addf %51, %50 : vector<2x8x1xf32>
    %53 = arith.divf %51, %52 : vector<2x8x1xf32>
    %cst_18 = arith.constant 2.000000e+00 : f32
    %54 = vector.broadcast %cst_18 : f32 to vector<2x8x32xf32>
    %55 = arith.mulf %54, %0 : vector<2x8x32xf32>
    %56 = vector.shape_cast %34 : vector<2x32xf32> to vector<2x1x32xf32>
    %57 = vector.broadcast %53 : vector<2x8x1xf32> to vector<2x8x32xf32>
    %58 = vector.broadcast %56 : vector<2x1x32xf32> to vector<2x8x32xf32>
    %59 = arith.mulf %57, %58 : vector<2x8x32xf32>
    %60 = arith.addf %55, %59 : vector<2x8x32xf32>
    %c1 = arith.constant 1 : index
    %c0_19 = arith.constant 0 : index
    %c0_20 = arith.constant 0 : index
    %61 = vector.load %arg4[%c1, %c0_19, %c0_20] : memref<2x32x32xf32, #tpu.memory_space<vmem>>, vector<1x32x32xf32>
    %62 = vector.shape_cast %61 : vector<1x32x32xf32> to vector<32x32xf32>
    %c1_21 = arith.constant 1 : index
    %63 = memref.load %arg6[%c1_21] : memref<2xf32, #tpu.memory_space<smem>>
    %c0_22 = arith.constant 0 : index
    %c0_23 = arith.constant 0 : index
    %c0_24 = arith.constant 0 : index
    %64 = vector.load %arg3[%c0_22, %c0_23, %c0_24] : memref<2x1x8xf32, #tpu.memory_space<vmem>>, vector<2x1x8xf32>
    %65 = vector.shape_cast %64 : vector<2x1x8xf32> to vector<2x8xf32>
    %66 = vector.shape_cast %8 : vector<1x32xf32> to vector<1x1x32xf32>
    %67 = vector.broadcast %66 : vector<1x1x32xf32> to vector<2x8x32xf32>
    %68 = arith.mulf %60, %67 : vector<2x8x32xf32>
    %cst_25 = arith.constant dense<0.000000e+00> : vector<2x8xf32>
    %69 = vector.multi_reduction <add>, %68, %cst_25 [2] : vector<2x8x32xf32> to vector<2x8xf32>
    %70 = arith.addf %69, %65 : vector<2x8xf32>
    %cst_26 = arith.constant dense<0xFF800000> : vector<2xf32>
    %71 = vector.multi_reduction <maximumf>, %70, %cst_26 [1] : vector<2x8xf32> to vector<2xf32>
    %72 = vector.shape_cast %71 : vector<2xf32> to vector<2x1xf32>
    %73 = vector.broadcast %72 : vector<2x1xf32> to vector<2x8xf32>
    %74 = arith.subf %70, %73 : vector<2x8xf32>
    %75 = math.exp %74 : vector<2x8xf32>
    %cst_27 = arith.constant dense<0.000000e+00> : vector<2xf32>
    %76 = vector.multi_reduction <add>, %75, %cst_27 [1] : vector<2x8xf32> to vector<2xf32>
    %77 = vector.shape_cast %76 : vector<2xf32> to vector<2x1xf32>
    %78 = tpu.reciprocal %77 {approx = true} : vector<2x1xf32> -> vector<2x1xf32>
    %79 = vector.broadcast %78 : vector<2x1xf32> to vector<2x8xf32>
    %80 = arith.mulf %75, %79 : vector<2x8xf32>
    %81 = vector.shape_cast %80 : vector<2x8xf32> to vector<2x8x1xf32>
    %82 = vector.broadcast %81 : vector<2x8x1xf32> to vector<2x8x32xf32>
    %83 = arith.mulf %82, %60 : vector<2x8x32xf32>
    %cst_28 = arith.constant dense<0.000000e+00> : vector<2x32xf32>
    %84 = vector.multi_reduction <add>, %83, %cst_28 [1] : vector<2x8x32xf32> to vector<2x32xf32>
    %cst_29 = arith.constant dense<0.000000e+00> : vector<2x32xf32>
    %85 = tpu.matmul %84, %62, %cst_29 {dimension_numbers = #tpu.dot_dimension_numbers<[1], [0], [0], [1], [0, 0, 1, 1], [], []>} : vector<2x32xf32>, vector<32x32xf32>, vector<2x32xf32> -> vector<2x32xf32>
    %86 = vector.broadcast %7 : vector<1x32xf32> to vector<2x32xf32>
    %87 = arith.addf %85, %86 : vector<2x32xf32>
    %88 = vector.shape_cast %10 : vector<1x32xf32> to vector<1x1x32xf32>
    %89 = vector.broadcast %88 : vector<1x1x32xf32> to vector<2x8x32xf32>
    %90 = arith.mulf %1, %89 : vector<2x8x32xf32>
    %cst_30 = arith.constant dense<0.000000e+00> : vector<2x8xf32>
    %91 = vector.multi_reduction <add>, %90, %cst_30 [2] : vector<2x8x32xf32> to vector<2x8xf32>
    %92 = vector.shape_cast %91 : vector<2x8xf32> to vector<2x8x1xf32>
    %93 = vector.broadcast %9 : vector<1x32xf32> to vector<2x32xf32>
    %94 = arith.mulf %87, %93 : vector<2x32xf32>
    %cst_31 = arith.constant dense<0.000000e+00> : vector<2xf32>
    %95 = vector.multi_reduction <add>, %94, %cst_31 [1] : vector<2x32xf32> to vector<2xf32>
    %96 = vector.shape_cast %95 : vector<2xf32> to vector<2x1xf32>
    %97 = vector.shape_cast %96 : vector<2x1xf32> to vector<2x1x1xf32>
    %98 = vector.broadcast %97 : vector<2x1x1xf32> to vector<2x8x1xf32>
    %99 = arith.addf %92, %98 : vector<2x8x1xf32>
    %100 = vector.broadcast %63 : f32 to vector<2x8x1xf32>
    %101 = arith.addf %99, %100 : vector<2x8x1xf32>
    %102 = arith.negf %101 : vector<2x8x1xf32>
    %103 = math.exp %102 : vector<2x8x1xf32>
    %cst_32 = arith.constant 1.000000e+00 : f32
    %104 = vector.broadcast %cst_32 : f32 to vector<2x8x1xf32>
    %105 = arith.addf %104, %103 : vector<2x8x1xf32>
    %106 = arith.divf %104, %105 : vector<2x8x1xf32>
    %cst_33 = arith.constant 2.000000e+00 : f32
    %107 = vector.broadcast %cst_33 : f32 to vector<2x8x32xf32>
    %108 = arith.mulf %107, %1 : vector<2x8x32xf32>
    %109 = vector.shape_cast %87 : vector<2x32xf32> to vector<2x1x32xf32>
    %110 = vector.broadcast %106 : vector<2x8x1xf32> to vector<2x8x32xf32>
    %111 = vector.broadcast %109 : vector<2x1x32xf32> to vector<2x8x32xf32>
    %112 = arith.mulf %110, %111 : vector<2x8x32xf32>
    %113 = arith.addf %108, %112 : vector<2x8x32xf32>
    %114 = arith.addf %60, %113 : vector<2x8x32xf32>
    %c0_34 = arith.constant 0 : index
    %c0_35 = arith.constant 0 : index
    %c0_36 = arith.constant 0 : index
    %115 = vector.load %arg7[%c0_34, %c0_35, %c0_36] : memref<2x8x32xf32, #tpu.memory_space<vmem>>, vector<2x8x32xf32>
    tpu.vector_store %arg7[%c0_34, %c0_35, %c0_36], %114 {strides = array<i32>} : memref<2x8x32xf32, #tpu.memory_space<vmem>>, vector<2x8x32xf32>,
    return
  }
  func.func @transform_0(%arg0: i32) -> (i32, i32, i32) {
    %c0_i32 = arith.constant 0 : i32
    %c0_i32_0 = arith.constant 0 : i32
    %c0_i32_1 = arith.constant 0 : i32
    return %arg0, %c0_i32, %c0_i32_0 : i32, i32, i32
  }
  func.func @transform_1(%arg0: i32) -> (i32, i32, i32) {
    %c0_i32 = arith.constant 0 : i32
    %c0_i32_0 = arith.constant 0 : i32
    %c0_i32_1 = arith.constant 0 : i32
    return %arg0, %c0_i32, %c0_i32_0 : i32, i32, i32
  }
  func.func @transform_2(%arg0: i32) -> (i32, i32, i32) {
    %c0_i32 = arith.constant 0 : i32
    %c0_i32_0 = arith.constant 0 : i32
    %c0_i32_1 = arith.constant 0 : i32
    return %arg0, %c0_i32, %c0_i32_0 : i32, i32, i32
  }
  func.func @transform_3(%arg0: i32) -> (i32, i32, i32) {
    %c0_i32 = arith.constant 0 : i32
    %c0_i32_0 = arith.constant 0 : i32
    %c0_i32_1 = arith.constant 0 : i32
    %c0_i32_2 = arith.constant 0 : i32
    return %c0_i32, %c0_i32_0, %c0_i32_1 : i32, i32, i32
  }
  func.func @transform_4(%arg0: i32) -> (i32, i32) {
    %c0_i32 = arith.constant 0 : i32
    %c0_i32_0 = arith.constant 0 : i32
    %c0_i32_1 = arith.constant 0 : i32
    return %c0_i32, %c0_i32_0 : i32, i32
  }
  func.func @transform_5(%arg0: i32) -> i32 {
    %c0_i32 = arith.constant 0 : i32
    %c0_i32_0 = arith.constant 0 : i32
    return %c0_i32 : i32
  }
  func.func @transform_6(%arg0: i32) -> (i32, i32, i32) {
    %c0_i32 = arith.constant 0 : i32
    %c0_i32_0 = arith.constant 0 : i32
    %c0_i32_1 = arith.constant 0 : i32
    return %arg0, %c0_i32, %c0_i32_0 : i32, i32, i32
  }
}

</mosaic_0001>

<llo_original>
// kernel: gat_relation.1
$region0: #{gat_relation.1}
  #allocation0 [shape = 'u32[]', space=smem, size = 0x4, offset = 0x4, fixed_abs, tag = 'smem constant byte address 0x4 - core index']
  #allocation1 [shape = 'u32[72,128]{1,0:T(1,128)}', space=vmem, size = 0x9000, scoped, tag = 'internal scratch']
  %s0 = inlined_call_operand.vmem [shape: f32[2,8,32], index: 0, kind: input, shape index: {}]
  %s1 = inlined_call_operand.vmem [shape: f32[2,8,32], index: 1, kind: input, shape index: {}]
  %s2 = inlined_call_operand.vmem [shape: f32[2,1,8], index: 2, kind: input, shape index: {}]
  %s3 = inlined_call_operand.vmem [shape: f32[2,32,32], index: 3, kind: input, shape index: {}]
  %s4 = inlined_call_operand.vmem [shape: f32[8,32], index: 4, kind: input, shape index: {}]
  %s5 = inlined_call_operand.vmem [shape: f32[2], index: 5, kind: input, shape index: {}]
  %s6 = inlined_call_operand.hbm [shape: f32[2,8,32], index: 6, kind: output, shape index: {}]
  %s7 = sld [smem:[#allocation0]]
  $region38: #{gat_relation.1} parent=0
    _
  %s9 = ssub.s32 1, %s7
  %s10 = scalar_select 0, %s9, %s7
  $region1: #{gat_relation.1} parent=0
    #allocation2 [shape = 'u8[512]{0}', space=smem, size = 0x200, scoped, tag = 'input window, operand 5, single buffered']
    #allocation3 [shape = 's32[1]{0}', space=sflag, size = 0x4, scoped, tag = 'scoped memory for gat_relation.1']
    #allocation4 [shape = 's32[1]{0}', space=sflag, size = 0x4, scoped, tag = 'scoped memory for gat_relation.1']
    #allocation5 [shape = 'u8[8192]{0}', space=vmem, size = 0x2000, scoped, tag = 'output window, operand 0, single buffered']
    %11 = vsyncpa [#allocation4], 0
    %12 = vsyncpa [#allocation3], 0
    // Predicated region
    $region2: #{gat_relation.1} parent=1 // pred_check
      _
    $region3: #{gat_relation.1} parent=1 // pred_check_branch
      %14 = sbr.rel (0) target = $region5
    $region4: #{gat_relation.1} parent=1 // pred_region
      _
    $region5: #{gat_relation.1} parent=1 // pred_fallthru
      _
    // Predicated region
    $region6: #{gat_relation.1} parent=1 // pred_check
      _
    $region7: #{gat_relation.1} parent=1 // pred_check_branch
      %16 = sbr.rel (0) target = $region9
    $region8: #{gat_relation.1} parent=1 // pred_region
      _
    $region9: #{gat_relation.1} parent=1 // pred_fallthru
      _
    // Predicated region
    $region10: #{gat_relation.1} parent=1 // pred_check
      _
    $region11: #{gat_relation.1} parent=1 // pred_check_branch
      %18 = sbr.rel (0) target = $region13
    $region12: #{gat_relation.1} parent=1 // pred_region
      _
    $region13: #{gat_relation.1} parent=1 // pred_fallthru
      _
    // Predicated region
    $region14: #{gat_relation.1} parent=1 // pred_check
      _
    $region15: #{gat_relation.1} parent=1 // pred_check_branch
      %20 = sbr.rel (0) target = $region17
    $region16: #{gat_relation.1} parent=1 // pred_region
      _
    $region17: #{gat_relation.1} parent=1 // pred_fallthru
      _
    // Predicated region
    $region18: #{gat_relation.1} parent=1 // pred_check
      _
    $region19: #{gat_relation.1} parent=1 // pred_check_branch
      %22 = sbr.rel (0) target = $region21
    $region20: #{gat_relation.1} parent=1 // pred_region
      _
    $region21: #{gat_relation.1} parent=1 // pred_fallthru
      _
    // Predicated region
    $region22: #{gat_relation.1} parent=1 // pred_check
      _
    $region23: #{gat_relation.1} parent=1 // pred_check_branch
      %24 = sbr.rel (0) target = $region25
    $region24: #{gat_relation.1} parent=1 // pred_region
      %26 = vsyncadd [#allocation4], 0
      %s28 = sshll.u32 %s5, 4
      %s29 = int_to_ptr.vmem [resolvable:$true] %s28
      %31 = dma.vmem_to_smem %s29, 16, [#allocation2], [#allocation4]
    $region25: #{gat_relation.1} parent=1 // pred_fallthru
      _
    // Predicated region
    $region26: #{gat_relation.1} parent=1 // pred_check
      _
    $region27: #{gat_relation.1} parent=1 // pred_check_branch
      %33 = sbr.rel (0) target = $region29
    $region28: #{gat_relation.1} parent=1 // pred_region
      %35 = dma.done [#allocation4], 16
    $region29: #{gat_relation.1} parent=1 // pred_fallthru
      _
    %36 = sfence
    %v37 = vld [vmem:[%s0] sm:$0xff]
    %v38 = vld [vmem:[%s0 + $0x8] sm:$0xff]
    %v39 = vld [vmem:[%s1] sm:$0xff]
    %v40 = vld [vmem:[%s1 + $0x8] sm:$0xff]
    %v41 = vld [vmem:[%s4] sm:$0xff]
    %v42 = vld [vmem:[%s3] sm:$0xff]
    %v43 = vld [vmem:[%s3 + $0x8] sm:$0xff]
    %v44 = vld [vmem:[%s3 + $0x10] sm:$0xff]
    %v45 = vld [vmem:[%s3 + $0x18] sm:$0xff]
    %s46 = sld [smem:[#allocation2]]
    %v47 = vperm.slane %v41, 1
    %v48 = vmul.f32 %v39, %v47
    %v49 = vmul.f32 %v40, %v47
    %vm50 = vcmask 261120
    %v51 = vsel %vm50, %v48, 0.0
    %52 = vadd.xlane.f32.xlu0 %v51
    %v53 = vpop.xlane.xlu0 %52
    %v54 = vsel %vm50, %v49, 0.0
    %55 = vadd.xlane.f32.xlu0 %v54
    %v56 = vpop.xlane.xlu0 %55
    %v59 = vlaneseq
    %v60 = vand.u32 %v59, 127
    %v61 = vperm.slane %v53, %v60
    %v62 = vperm.slane %v56, %v60
    %vm63 = vcmask 1041409
    %v64 = vsel %vm63, %v62, %v61
    %vm66 = vcmask 58368
    %v67 = vsel %vm66, %v64, -inf
    %68 = vmax.xlane.f32.xlu0 %v67
    %v69 = vpop.xlane.xlu0 %68
    %v71 = vperm.slane %v69, 0
    %v72 = vperm.slane %v69, 1
    %v75 = vsub.f32 %v53, %v71
    %v76 = vsub.f32 %v56, %v72
    %v77 = vmul.f32 %v75, 1.442695
    %v78 = vpow.pop %v77
    %v79 = vmul.f32 %v76, 1.442695
    %v80 = vpow.pop %v79
    %83 = vset.pattern.permute.xlu0 0
    %84 = vperm.xlu0 %83, %v78
    %v85 = vpop.permute.xlu0 %84
    %86 = vset.pattern.permute.xlu0 0
    %87 = vperm.xlu0 %86, %v80
    %v88 = vpop.permute.xlu0 %87
    %v89 = vperm.slane %v85, %v60
    %v90 = vperm.slane %v88, %v60
    %v91 = vsel %vm63, %v90, %v89
    %v93 = vsel %vm66, %v91, 0.0
    %94 = vadd.xlane.f32.xlu0 %v93
    %v95 = vpop.xlane.xlu0 %94
    %v96 = vrcp.pop %v95
    %v98 = vperm.slane %v96, 0
    %v99 = vperm.slane %v96, 1
    %v102 = vmul.f32 %v78, %v98
    %v103 = vmul.f32 %v80, %v99
    %105 = vset.pattern.permute.xlu0 0
    %106 = vperm.xlu0 %105, %v102
    %v107 = vpop.permute.xlu0 %106
    %110 = vset.pattern.permute.xlu0 0
    %111 = vperm.xlu0 %110, %v103
    %v112 = vpop.permute.xlu0 %111
    %v114 = vmul.f32 %v107, %v39
    %v115 = vmul.f32 %v112, %v40
    %v116 = vsel %vm50, %v114, 0.0
    %v117 = vrot.slane %v116, 4
    %v118 = vadd.f32 %v116, %v117
    %v119 = vrot.slane %v118, 2
    %v120 = vadd.f32 %v118, %v119
    %v121 = vrot.slane %v120, 1
    %v122 = vadd.f32 %v120, %v121
    %v123 = vsel %vm50, %v115, 0.0
    %v124 = vrot.slane %v123, 4
    %v125 = vadd.f32 %v123, %v124
    %v126 = vrot.slane %v125, 2
    %v127 = vadd.f32 %v125, %v126
    %v128 = vrot.slane %v127, 1
    %v129 = vadd.f32 %v127, %v128
    %v130 = vperm.slane %v41, 0
    %v133 = vsel %vm63, %v129, %v122
    %v134 = vsel %vm50, %v133, 0
    %136 = vmatpush.msra.mxu0 0.0
    %137 = vmatpush.msra.mxu0 0.0
    %138 = vmatpush.msra.mxu0 0.0
    %139 = vmatpush.msra.mxu0 0.0
    %140 = vmatpush.msra.mxu0 0.0
    %141 = vmatpush.msra.mxu0 0.0
    %142 = vmatpush.msra.mxu0 0.0
    %143 = vmatpush.msra.mxu0 0.0
    %144 = vmatpush.msra.mxu0 0.0
    %145 = vmatpush.msra.mxu0 0.0
    %146 = vmatpush.msra.mxu0 0.0
    %147 = vmatpush.msra.mxu0 0.0
    %148 = vmatpush.msra.mxu0 %v45
    %149 = vmatpush.msra.mxu0 %v44
    %150 = vmatpush.msra.mxu0 %v43
    %151 = vmatpush.msra.mxu0 %v42
    %152 = vmatmul.f32.gmra.mxu0 %v134
    %v153 = vpop.f32.mrf.mxu0
    %v154 = vadd.f32 %v130, %v153
    %155 = vdwg.mxu0
    %v156 = vperm.slane %v41, 3
    %v157 = vmul.f32 %v37, %v156
    %v158 = vmul.f32 %v38, %v156
    %v159 = vsel %vm50, %v157, 0.0
    %160 = vadd.xlane.f32.xlu0 %v159
    %v161 = vpop.xlane.xlu0 %160
    %v162 = vsel %vm50, %v158, 0.0
    %163 = vadd.xlane.f32.xlu0 %v162
    %v164 = vpop.xlane.xlu0 %163
    %v165 = vperm.slane %v41, 2
    %v166 = vmul.f32 %v154, %v165
    %vm167 = vcmask 254976
    %v168 = vsel %vm167, %v166, 0.0
    %169 = vadd.xlane.f32.xlu0 %v168
    %v170 = vpop.xlane.xlu0 %169
    %v172 = vperm.slane %v170, 0
    %v173 = vperm.slane %v170, 1
    %v176 = vadd.f32 %v161, %v172
    %v177 = vadd.f32 %v164, %v173
    %v178 = vstv %s46
    %v179 = vadd.f32 %v176, %v178
    %v180 = vadd.f32 %v177, %v178
    %v181 = vxor.u32 %v179, 2147483648
    %v182 = vxor.u32 %v180, 2147483648
    %v183 = vmul.f32 %v181, 1.442695
    %v184 = vpow.pop %v183
    %v185 = vmul.f32 %v182, 1.442695
    %v186 = vpow.pop %v185
    %v187 = vadd.f32 %v184, 1.0
    %v188 = vadd.f32 %v186, 1.0
    %v189 = vrcp.pop %v187
    %v190 = vmul.f32 %v187, %v189
    %v191 = vsub.f32 1.0, %v190
    %v192 = vmul.f32 %v189, %v191
    %v193 = vadd.f32 %v189, %v192
    %vm194 = vweird.f32 %v187
    %vm195 = vweird.f32 %v189
    %vm196 = vmor %vm194, %vm195
    %v197 = vsel %vm196, %v189, %v193
    %v198 = vand.u32 2147483647, %v187
    %vm199 = vcmp.eq.f32.partialorder %v198, 8.507059e+37
    %v200 = vand.u32 %v187, 2147483648
    %v201 = vor.u32 1.1754944e-38, %v200
    %v202 = vsel %vm199, %v201, %v197
    %v203 = vmul.f32 1.0, %v202
    %v204 = vrcp.pop %v188
    %v205 = vmul.f32 %v188, %v204
    %v206 = vsub.f32 1.0, %v205
    %v207 = vmul.f32 %v204, %v206
    %v208 = vadd.f32 %v204, %v207
    %vm209 = vweird.f32 %v188
    %vm210 = vweird.f32 %v204
    %vm211 = vmor %vm209, %vm210
    %v212 = vsel %vm211, %v204, %v208
    %v213 = vand.u32 2147483647, %v188
    %vm214 = vcmp.eq.f32.partialorder %v213, 8.507059e+37
    %v215 = vand.u32 %v188, 2147483648
    %v216 = vor.u32 1.1754944e-38, %v215
    %v217 = vsel %vm214, %v216, %v212
    %v218 = vmul.f32 1.0, %v217
    %v219 = vmul.f32 %v37, 2.0
    %v220 = vmul.f32 %v38, 2.0
    %v222 = vrot.slane %v154, 1
    %v223 = vperm.slane %v154, 0
    %v224 = vperm.slane %v222, 0
    %v227 = vmul.f32 %v203, %v223
    %v228 = vmul.f32 %v218, %v224
    %v229 = vadd.f32 %v219, %v227
    %v230 = vadd.f32 %v220, %v228
    %s231 = scalar_lea.vmem %s3, 32
    %v232 = vld [vmem:[%s231] sm:$0xff]
    %v233 = vld [vmem:[%s231 + $0x8] sm:$0xff]
    %v234 = vld [vmem:[%s231 + $0x10] sm:$0xff]
    %v235 = vld [vmem:[%s231 + $0x18] sm:$0xff]
    %s236 = sld [smem:[#allocation2 + $0x1]]
    %v237 = vld [vmem:[%s2] sm:$0x1]
    %v238 = vld [vmem:[%s2 + $0x1] sm:$0x1]
    %v239 = vperm.slane %v41, 5
    %v240 = vmul.f32 %v229, %v239
    %v241 = vmul.f32 %v230, %v239
    %v242 = vsel %vm50, %v240, 0.0
    %243 = vadd.xlane.f32.xlu0 %v242
    %v244 = vpop.xlane.xlu0 %243
    %v245 = vsel %vm50, %v241, 0.0
    %246 = vadd.xlane.f32.xlu0 %v245
    %v247 = vpop.xlane.xlu0 %246
    %v250 = vperm.slane %v237, 0
    %v251 = vperm.slane %v238, 0
    %v252 = vlaneseq
    %v253 = vshrl.u32 %v252, 7
    %255 = vset.pattern.permute.xlu0 %v253
    %256 = vperm.xlu0 %255, %v250
    %v257 = vpop.permute.xlu0 %256
    %v258 = vlaneseq
    %v259 = vshrl.u32 %v258, 7
    %261 = vset.pattern.permute.xlu0 %v259
    %262 = vperm.xlu0 %261, %v251
    %v263 = vpop.permute.xlu0 %262
    %v266 = vadd.f32 %v244, %v257
    %v267 = vadd.f32 %v247, %v263
    %270 = vset.pattern.permute.xlu0 0
    %271 = vperm.xlu0 %270, %v266
    %v272 = vpop.permute.xlu0 %271
    %273 = vset.pattern.permute.xlu0 0
    %274 = vperm.xlu0 %273, %v267
    %v275 = vpop.permute.xlu0 %274
    %v276 = vperm.slane %v272, %v60
    %v277 = vperm.slane %v275, %v60
    %v278 = vsel %vm63, %v277, %v276
    %v280 = vsel %vm66, %v278, -inf
    %281 = vmax.xlane.f32.xlu0 %v280
    %v282 = vpop.xlane.xlu0 %281
    %v284 = vperm.slane %v282, 0
    %v285 = vperm.slane %v282, 1
    %v288 = vsub.f32 %v266, %v284
    %v289 = vsub.f32 %v267, %v285
    %v290 = vmul.f32 %v288, 1.442695
    %v291 = vpow.pop %v290
    %v292 = vmul.f32 %v289, 1.442695
    %v293 = vpow.pop %v292
    %296 = vset.pattern.permute.xlu0 0
    %297 = vperm.xlu0 %296, %v291
    %v298 = vpop.permute.xlu0 %297
    %299 = vset.pattern.permute.xlu0 0
    %300 = vperm.xlu0 %299, %v293
    %v301 = vpop.permute.xlu0 %300
    %v302 = vperm.slane %v298, %v60
    %v303 = vperm.slane %v301, %v60
    %v304 = vsel %vm63, %v303, %v302
    %v306 = vsel %vm66, %v304, 0.0
    %307 = vadd.xlane.f32.xlu0 %v306
    %v308 = vpop.xlane.xlu0 %307
    %v309 = vrcp.pop %v308
    %v311 = vperm.slane %v309, 0
    %v312 = vperm.slane %v309, 1
    %v315 = vmul.f32 %v291, %v311
    %v316 = vmul.f32 %v293, %v312
    %318 = vset.pattern.permute.xlu0 0
    %319 = vperm.xlu0 %318, %v315
    %v320 = vpop.permute.xlu0 %319
    %323 = vset.pattern.permute.xlu0 0
    %324 = vperm.xlu0 %323, %v316
    %v325 = vpop.permute.xlu0 %324
    %v327 = vmul.f32 %v320, %v229
    %v328 = vmul.f32 %v325, %v230
    %v329 = vsel %vm50, %v327, 0.0
    %v330 = vrot.slane %v329, 4
    %v331 = vadd.f32 %v329, %v330
    %v332 = vrot.slane %v331, 2
    %v333 = vadd.f32 %v331, %v332
    %v334 = vrot.slane %v333, 1
    %v335 = vadd.f32 %v333, %v334
    %v336 = vsel %vm50, %v328, 0.0
    %v337 = vrot.slane %v336, 4
    %v338 = vadd.f32 %v336, %v337
    %v339 = vrot.slane %v338, 2
    %v340 = vadd.f32 %v338, %v339
    %v341 = vrot.slane %v340, 1
    %v342 = vadd.f32 %v340, %v341
    %v343 = vperm.slane %v41, 4
    %v346 = vsel %vm63, %v342, %v335
    %v347 = vsel %vm50, %v346, 0
    %349 = vmatpush.msra.mxu0 0.0
    %350 = vmatpush.msra.mxu0 0.0
    %351 = vmatpush.msra.mxu0 0.0
    %352 = vmatpush.msra.mxu0 0.0
    %353 = vmatpush.msra.mxu0 0.0
    %354 = vmatpush.msra.mxu0 0.0
    %355 = vmatpush.msra.mxu0 0.0
    %356 = vmatpush.msra.mxu0 0.0
    %357 = vmatpush.msra.mxu0 0.0
    %358 = vmatpush.msra.mxu0 0.0
    %359 = vmatpush.msra.mxu0 0.0
    %360 = vmatpush.msra.mxu0 0.0
    %361 = vmatpush.msra.mxu0 %v235
    %362 = vmatpush.msra.mxu0 %v234
    %363 = vmatpush.msra.mxu0 %v233
    %364 = vmatpush.msra.mxu0 %v232
    %365 = vmatmul.f32.gmra.mxu0 %v347
    %v366 = vpop.f32.mrf.mxu0
    %v367 = vadd.f32 %v343, %v366
    %368 = vdwg.mxu0
    %v369 = vperm.slane %v41, 7
    %v370 = vmul.f32 %v39, %v369
    %v371 = vmul.f32 %v40, %v369
    %v372 = vsel %vm50, %v370, 0.0
    %373 = vadd.xlane.f32.xlu0 %v372
    %v374 = vpop.xlane.xlu0 %373
    %v375 = vsel %vm50, %v371, 0.0
    %376 = vadd.xlane.f32.xlu0 %v375
    %v377 = vpop.xlane.xlu0 %376
    %v378 = vperm.slane %v41, 6
    %v379 = vmul.f32 %v367, %v378
    %v380 = vsel %vm167, %v379, 0.0
    %381 = vadd.xlane.f32.xlu0 %v380
    %v382 = vpop.xlane.xlu0 %381
    %v384 = vperm.slane %v382, 0
    %v385 = vperm.slane %v382, 1
    %v388 = vadd.f32 %v374, %v384
    %v389 = vadd.f32 %v377, %v385
    %v390 = vstv %s236
    %v391 = vadd.f32 %v388, %v390
    %v392 = vadd.f32 %v389, %v390
    %v393 = vxor.u32 %v391, 2147483648
    %v394 = vxor.u32 %v392, 2147483648
    %v395 = vmul.f32 %v393, 1.442695
    %v396 = vpow.pop %v395
    %v397 = vmul.f32 %v394, 1.442695
    %v398 = vpow.pop %v397
    %v399 = vadd.f32 %v396, 1.0
    %v400 = vadd.f32 %v398, 1.0
    %v401 = vrcp.pop %v399
    %v402 = vmul.f32 %v399, %v401
    %v403 = vsub.f32 1.0, %v402
    %v404 = vmul.f32 %v401, %v403
    %v405 = vadd.f32 %v401, %v404
    %vm406 = vweird.f32 %v399
    %vm407 = vweird.f32 %v401
    %vm408 = vmor %vm406, %vm407
    %v409 = vsel %vm408, %v401, %v405
    %v410 = vand.u32 2147483647, %v399
    %vm411 = vcmp.eq.f32.partialorder %v410, 8.507059e+37
    %v412 = vand.u32 %v399, 2147483648
    %v413 = vor.u32 1.1754944e-38, %v412
    %v414 = vsel %vm411, %v413, %v409
    %v415 = vmul.f32 1.0, %v414
    %v416 = vrcp.pop %v400
    %v417 = vmul.f32 %v400, %v416
    %v418 = vsub.f32 1.0, %v417
    %v419 = vmul.f32 %v416, %v418
    %v420 = vadd.f32 %v416, %v419
    %vm421 = vweird.f32 %v400
    %vm422 = vweird.f32 %v416
    %vm423 = vmor %vm421, %vm422
    %v424 = vsel %vm423, %v416, %v420
    %v425 = vand.u32 2147483647, %v400
    %vm426 = vcmp.eq.f32.partialorder %v425, 8.507059e+37
    %v427 = vand.u32 %v400, 2147483648
    %v428 = vor.u32 1.1754944e-38, %v427
    %v429 = vsel %vm426, %v428, %v424
    %v430 = vmul.f32 1.0, %v429
    %v431 = vmul.f32 %v39, 2.0
    %v432 = vmul.f32 %v40, 2.0
    %v434 = vrot.slane %v367, 1
    %v435 = vperm.slane %v367, 0
    %v436 = vperm.slane %v434, 0
    %v439 = vmul.f32 %v415, %v435
    %v440 = vmul.f32 %v430, %v436
    %v441 = vadd.f32 %v431, %v439
    %v442 = vadd.f32 %v432, %v440
    %v443 = vadd.f32 %v229, %v441
    %v444 = vadd.f32 %v230, %v442
    %445 = vst.msk [vmem:[#allocation5] sm:$0xff] %vm50, %v443
    %446 = vst.msk [vmem:[#allocation5 + $0x8] sm:$0xff] %vm50, %v444
    // Predicated region
    $region30: #{gat_relation.1} parent=1 // pred_check
      _
    $region31: #{gat_relation.1} parent=1 // pred_check_branch
      %448 = sbr.rel (0) target = $region33
    $region32: #{gat_relation.1} parent=1 // pred_region
      %450 = vsyncadd [#allocation3], 0
      %s451 = sshll.u32 [#allocation5], 4
      %s452 = int_to_ptr.vmem [resolvable:$true] %s451
      %s453 = sshll.u32 %s6, 4
      %s454 = int_to_ptr.hbm [resolvable:$true] %s453
      %459 = dma.vmem_to_hbm [thread:$0]  %s452, 256, %s454, [#allocation3], 128, 128, 8
    $region33: #{gat_relation.1} parent=1 // pred_fallthru
      _
    // Predicated region
    $region34: #{gat_relation.1} parent=1 // pred_check
      _
    $region35: #{gat_relation.1} parent=1 // pred_check_branch
      %461 = sbr.rel (0) target = $region37
    $region36: #{gat_relation.1} parent=1 // pred_region
      %463 = dma.done [#allocation3], 256
    $region37: #{gat_relation.1} parent=1 // pred_fallthru
      _
    %464 = vsyncpa [#allocation3], 1
    %465 = vsyncpa [#allocation4], 1

</llo_original>
